<compile_context>
chip_gen: v7x
topology: tpu7x:2x2x1
jax: 0.10.0
libtpu: 0.0.40
codegen_flags: <defaults>
</compile_context>

<pallas_src>
import jax
import jax.numpy as jnp
from jax.experimental import pallas as pl
from jax.experimental.pallas import tpu as pltpu


# ---------------------------------------------------------------------------
# Pallas kernel: per (row-tile, time-tile) modulate -> ReLU -> modulate
# ---------------------------------------------------------------------------
def _film_relu_film_kernel(g1_ref, b1_ref, g2_ref, b2_ref, x_ref, o_ref):
    # g*/b*: (tR, 1) f32 — precomputed (gamma + 1) and beta, resident across T.
    # x, o : (tR, tT)
    x = x_ref[...].astype(jnp.float32)
    y = x * g1_ref[...] + b1_ref[...]          # FiLM #1
    y = jnp.maximum(y, 0.0)                    # ReLU (non-FiLM layer)
    y = y * g2_ref[...] + b2_ref[...]          # FiLM #2
    o_ref[...] = y.astype(o_ref.dtype)


# ---------------------------------------------------------------------------
# Tile sizing from a per-generation VMEM budget
# ---------------------------------------------------------------------------
def _vmem_budget_bytes():
    """Byte budget for the four (2-in + 2-out) double-buffered x/o slabs."""
    try:
        cap = pltpu.get_tpu_info().vmem_capacity_bytes
    except Exception:
        cap = 64 << 20  # conservative (v7x physical VMEM)
    return min(cap // 4, 32 << 20)


def _pick_tiles(R, T, itemsize, row_tile=None, time_tile=None, budget_bytes=None):
    """Pick (tR, tT): tR multiple of 8 (or == R), tT multiple of 128 (or == T),
    such that 4 * tR * tT * itemsize fits the VMEM budget."""
    if budget_bytes is None:
        budget_bytes = _vmem_budget_bytes()
    per_buf = max(budget_bytes // 4, 8 * 128 * itemsize)

    tR_min = R if R < 8 else 8

    # ---- time tile: prefer full rows (tT = T), else largest multiple of 128 ----
    if time_tile is not None:
        assert time_tile == T or (0 < time_tile <= T and time_tile % 128 == 0), \
            "time_tile must equal T or be a positive multiple of 128"
        tT = time_tile
    elif T <= 128 or tR_min * T * itemsize <= per_buf:
        tT = T
    else:
        tT = (per_buf // (tR_min * itemsize)) // 128 * 128
        tT = max(128, min(tT, (T // 128) * 128))

    # ---- row tile: as many rows as fit the budget, multiple of 8 (or all of R) ----
    if row_tile is not None:
        assert row_tile == R or (0 < row_tile <= R and row_tile % 8 == 0), \
            "row_tile must equal R or be a positive multiple of 8"
        tR = row_tile
    else:
        fit = per_buf // (tT * itemsize)
        tR = R if fit >= R else max(tR_min, (fit // 8) * 8)

    # Megacore (v7x): make sure non-trivial problems produce >= 2 parallel blocks.
    if row_tile is None and tR == R and tT == T and R >= 16:
        tR = max(8, ((R // 2) // 8) * 8)

    return tR, tT


# ---------------------------------------------------------------------------
# Wrapper
# ---------------------------------------------------------------------------
def pack_params(p):
    """Precompute the packed projection once (the '+1' of FiLM is folded into
    the gamma bias columns).  proj = cond @ w_all + b_all yields
    [gamma1+1, beta1, gamma2+1, beta2] along the last axis."""
    w_all = jnp.concatenate([p["wg1"], p["wb1"], p["wg2"], p["wb2"]], axis=1)   # (D, 4C)
    b_all = jnp.concatenate([p["bg1"] + 1.0, p["bb1"],
                             p["bg2"] + 1.0, p["bb2"]], axis=1)                  # (1, 4C)
    return w_all, b_all


def sequential_with_film(x, cond, packed, *, row_tile=None, time_tile=None):
    """x: (B, C, T), cond: (B, D), packed = pack_params(params)."""
    B, C, T = x.shape
    R = B * C
    w_all, b_all = packed

    # --- one batched GEMM for all four projections (XLA, MXU-friendly) ------
    proj = cond.astype(jnp.float32) @ w_all + b_all            # (B, 4C)
    g1, b1, g2, b2 = jnp.split(proj, 4, axis=1)                # (B, C) each
    g1 = g1.reshape(R, 1)
    b1 = b1.reshape(R, 1)
    g2 = g2.reshape(R, 1)
    b2 = b2.reshape(R, 1)

    x2 = x.reshape(R, T)
    itemsize = x.dtype.itemsize
    tR, tT = _pick_tiles(R, T, itemsize, row_tile, time_tile)
    nR, nT = pl.cdiv(R, tR), pl.cdiv(T, tT)

    # modulation vectors: per-row-tile, resident across the time axis
    mod_spec = pl.BlockSpec((tR, 1), lambda r, t: (r, 0))
    xio_spec = pl.BlockSpec((tR, tT), lambda r, t: (r, t))

    working = 4 * tR * tT * itemsize + 8 * tR * 4              # x/o + mod double buffers
    vmem_limit = int(min(max(2 * working, 32 << 20), 96 << 20))

    cost = pl.CostEstimate(
        flops=5 * R * T,                                       # fma, fma, relu
        transcendentals=0,
        bytes_accessed=2 * R * T * itemsize + 4 * R * 4)

    out2 = pl.pallas_call(
        _film_relu_film_kernel,
        out_shape=jax.ShapeDtypeStruct((R, T), x.dtype),
        grid=(nR, nT),
        in_specs=[mod_spec, mod_spec, mod_spec, mod_spec, xio_spec],
        out_specs=xio_spec,
        compiler_params=pltpu.CompilerParams(
            dimension_semantics=("parallel", "parallel"),
            vmem_limit_bytes=vmem_limit),
        cost_estimate=cost,
    )(g1, b1, g2, b2, x2)

    return out2.reshape(B, C, T)


# ---------------------------------------------------------------------------
# Deterministic parameter init (PyTorch nn.Linear style: U(-1/sqrt(in), 1/sqrt(in)))
# Weights stored transposed as (D_in, D_out), so projections are cond @ W.
# ---------------------------------------------------------------------------
def init_params(key, d_cond, channels):
    bound = 1.0 / jnp.sqrt(jnp.float32(d_cond))
    keys = jax.random.split(key, 8)
    u = lambda k, shape: jax.random.uniform(k, shape, jnp.float32, -bound, bound)
    return {
        "wb1": u(keys[0], (d_cond, channels)), "bb1": u(keys[1], (1, channels)),
        "wg1": u(keys[2], (d_cond, channels)), "bg1": u(keys[3], (1, channels)),
        "wb2": u(keys[4], (d_cond, channels)), "bb2": u(keys[5], (1, channels)),
        "wg2": u(keys[6], (d_cond, channels)), "bg2": u(keys[7], (1, channels)),
    }


# Pure-JAX reference mirroring the PyTorch forward exactly.
def reference(x, cond, p):
    def film(x, r, w_beta, b_beta, w_gamma, b_gamma):
        beta = r @ w_beta + b_beta          # (B, C)
        gamma = r @ w_gamma + b_gamma       # (B, C)
        return x * (gamma + 1.0)[:, :, None] + beta[:, :, None]

    y = film(x, cond, p["wb1"], p["bb1"], p["wg1"], p["bg1"])
    y = jnp.maximum(y, 0.0)
    y = film(y, cond, p["wb2"], p["bb2"], p["wg2"], p["bg2"])
    return y


if __name__ == "__main__":
    B, C, T, D = 2, 8, 256, 32   # batch, channels, time, cond dim

    key = jax.random.PRNGKey(0)
    kx, kc, kp = jax.random.split(key, 3)
    x = jax.random.normal(kx, (B, C, T), jnp.float32)
    cond = jax.random.normal(kc, (B, D), jnp.float32)
    params = init_params(kp, D, C)
    packed = pack_params(params)

    out = sequential_with_film(x, cond, packed)
    out = jax.block_until_ready(out)

    ref = reference(x, cond, params)
    assert out.shape == (B, C, T)
    assert jnp.allclose(out, ref, atol=2e-5, rtol=2e-5), "mismatch vs reference"

    print("KERNEL_OK")
</pallas_src>

<mosaic_0001>
module attributes {stable_mosaic.version = 11 : i64} {
  func.func @_film_relu_film_kernel(%arg0: i32, %arg1: i32, %arg2: memref<8x1xf32, #tpu.memory_space<vmem>>, %arg3: memref<8x1xf32, #tpu.memory_space<vmem>>, %arg4: memref<8x1xf32, #tpu.memory_space<vmem>>, %arg5: memref<8x1xf32, #tpu.memory_space<vmem>>, %arg6: memref<8x256xf32, #tpu.memory_space<vmem>>, %arg7: memref<8x256xf32, #tpu.memory_space<vmem>>) attributes {dimension_semantics = [#tpu.dimension_semantics<parallel>, #tpu.dimension_semantics<parallel>], iteration_bounds = array<i64: 2, 1>, scalar_prefetch = 0 : i64, scratch_operands = 0 : i64, tpu.core_type = #tpu.core_type<tc>, window_params = [{transform_indices = @transform_0, window_bounds = array<i64: 8, 1>}, {transform_indices = @transform_1, window_bounds = array<i64: 8, 1>}, {transform_indices = @transform_2, window_bounds = array<i64: 8, 1>}, {transform_indices = @transform_3, window_bounds = array<i64: 8, 1>}, {transform_indices = @transform_4, window_bounds = array<i64: 8, 256>}, {transform_indices = @transform_5, window_bounds = array<i64: 8, 256>}]} {
    %c0 = arith.constant 0 : index
    %c0_0 = arith.constant 0 : index
    %0 = vector.load %arg6[%c0, %c0_0] : memref<8x256xf32, #tpu.memory_space<vmem>>, vector<8x256xf32>
    %c0_1 = arith.constant 0 : index
    %c0_2 = arith.constant 0 : index
    %1 = vector.load %arg2[%c0_1, %c0_2] : memref<8x1xf32, #tpu.memory_space<vmem>>, vector<8x1xf32>
    %2 = vector.broadcast %1 : vector<8x1xf32> to vector<8x256xf32>
    %3 = arith.mulf %0, %2 : vector<8x256xf32>
    %c0_3 = arith.constant 0 : index
    %c0_4 = arith.constant 0 : index
    %4 = vector.load %arg3[%c0_3, %c0_4] : memref<8x1xf32, #tpu.memory_space<vmem>>, vector<8x1xf32>
    %5 = vector.broadcast %4 : vector<8x1xf32> to vector<8x256xf32>
    %6 = arith.addf %3, %5 : vector<8x256xf32>
    %cst = arith.constant 0.000000e+00 : f32
    %7 = vector.broadcast %cst : f32 to vector<8x256xf32>
    %8 = arith.maximumf %6, %7 : vector<8x256xf32>
    %c0_5 = arith.constant 0 : index
    %c0_6 = arith.constant 0 : index
    %9 = vector.load %arg4[%c0_5, %c0_6] : memref<8x1xf32, #tpu.memory_space<vmem>>, vector<8x1xf32>
    %10 = vector.broadcast %9 : vector<8x1xf32> to vector<8x256xf32>
    %11 = arith.mulf %8, %10 : vector<8x256xf32>
    %c0_7 = arith.constant 0 : index
    %c0_8 = arith.constant 0 : index
    %12 = vector.load %arg5[%c0_7, %c0_8] : memref<8x1xf32, #tpu.memory_space<vmem>>, vector<8x1xf32>
    %13 = vector.broadcast %12 : vector<8x1xf32> to vector<8x256xf32>
    %14 = arith.addf %11, %13 : vector<8x256xf32>
    %c0_9 = arith.constant 0 : index
    %c0_10 = arith.constant 0 : index
    %15 = vector.load %arg7[%c0_9, %c0_10] : memref<8x256xf32, #tpu.memory_space<vmem>>, vector<8x256xf32>
    tpu.vector_store %arg7[%c0_9, %c0_10], %14 {strides = array<i32>} : memref<8x256xf32, #tpu.memory_space<vmem>>, vector<8x256xf32>,
    return
  }
  func.func @transform_0(%arg0: i32, %arg1: i32) -> (i32, i32) {
    %c0_i32 = arith.constant 0 : i32
    %c0_i32_0 = arith.constant 0 : i32
    return %arg0, %c0_i32 : i32, i32
  }
  func.func @transform_1(%arg0: i32, %arg1: i32) -> (i32, i32) {
    %c0_i32 = arith.constant 0 : i32
    %c0_i32_0 = arith.constant 0 : i32
    return %arg0, %c0_i32 : i32, i32
  }
  func.func @transform_2(%arg0: i32, %arg1: i32) -> (i32, i32) {
    %c0_i32 = arith.constant 0 : i32
    %c0_i32_0 = arith.constant 0 : i32
    return %arg0, %c0_i32 : i32, i32
  }
  func.func @transform_3(%arg0: i32, %arg1: i32) -> (i32, i32) {
    %c0_i32 = arith.constant 0 : i32
    %c0_i32_0 = arith.constant 0 : i32
    return %arg0, %c0_i32 : i32, i32
  }
  func.func @transform_4(%arg0: i32, %arg1: i32) -> (i32, i32) {
    %c0_i32 = arith.constant 0 : i32
    return %arg0, %arg1 : i32, i32
  }
  func.func @transform_5(%arg0: i32, %arg1: i32) -> (i32, i32) {
    %c0_i32 = arith.constant 0 : i32
    return %arg0, %arg1 : i32, i32
  }
}

</mosaic_0001>

<llo_original>
// kernel: tpu_custom_call.1
$region0: #{tpu_custom_call.1}
  #allocation0 [shape = 'u32[]', space=smem, size = 0x4, offset = 0x4, fixed_abs, tag = 'smem constant byte address 0x4 - core index']
  #allocation1 [shape = 'u32[144,128]{1,0:T(1,128)}', space=vmem, size = 0x12000, scoped, tag = 'internal scratch']
  %s0 = inlined_call_operand.vmem [shape: f32[16,1], index: 0, kind: input, shape index: {}]
  %s1 = inlined_call_operand.vmem [shape: f32[16,1], index: 1, kind: input, shape index: {}]
  %s2 = inlined_call_operand.vmem [shape: f32[16,1], index: 2, kind: input, shape index: {}]
  %s3 = inlined_call_operand.vmem [shape: f32[16,1], index: 3, kind: input, shape index: {}]
  %s4 = inlined_call_operand.vmem [shape: f32[16,256], index: 4, kind: input, shape index: {}]
  %s5 = inlined_call_operand.hbm [shape: f32[16,256], index: 5, kind: output, shape index: {}]
  %s6 = sld [smem:[#allocation0]]
  $region53: #{tpu_custom_call.1} parent=0
    _
  %s8 = ssub.s32 1, %s6
  %s9 = scalar_select 0, %s8, %s6
  $region1: #{tpu_custom_call.1} parent=0
    #allocation2 [shape = 'u8[16384]{0}', space=vmem, size = 0x4000, scoped, tag = 'output window, operand 0']
    #allocation3 [shape = 's32[2]{0}', space=sflag, size = 0x8, scoped, tag = 'scoped memory for tpu_custom_call.1']
    %10 = vsyncpa [#allocation3], 0
    %s11 = scalar_lea.sflag [#allocation3], 1
    %12 = vsyncpa %s11, 0
    loop: start=0, step=1, limit=4
    $region2: #{tpu_custom_call.1} parent=1 // loop_pre_header
      _
    $region3: #{tpu_custom_call.1} parent=1 // loop_header
      %s14 = sphi 0, %s18
      %p15 = scmp.ge.s32.totalorder %s14, 4
      %s21 = sphi 0, %s33
      %s22 = sphi 0, %s29
      %s23 = sphi 0, %s21
      %s24 = sphi 0, %s22
      %s25 = sphi 0, %s23
      %s26 = sphi 0, %s24
      %s36 = sphi 0, %s38
      %s39 = sphi 0, %s36
      %s40 = sphi 0, %s39
      %s56 = sphi 0, %s40
      %s62 = sphi 0, %s64
      %s65 = sphi 0, %s62
      %s66 = sphi 0, %s65
      %s82 = sphi 0, %s66
      %s88 = sphi 0, %s90
      %s91 = sphi 0, %s88
      %s92 = sphi 0, %s91
      %s108 = sphi 0, %s92
      %s114 = sphi 0, %s116
      %s117 = sphi 0, %s114
      %s118 = sphi 0, %s117
      %s134 = sphi 0, %s118
      %s142 = sphi 0, %s144
      %s145 = sphi 0, %s142
      %s146 = sphi 0, %s145
      %s162 = sphi 0, %s146
      %s170 = sphi 0, %s172
      %s173 = sphi 0, %s170
      %s174 = sphi 0, %s173
      %s190 = sphi 0, %s174
    $region4: #{tpu_custom_call.1} parent=1 // loop_header_branch
      %17 = sbr.rel (%p15) target = $region8
    $region5: #{tpu_custom_call.1} parent=1 // loop_body
      %s19 = ssub.s32 %s14, 1
      %s20 = ssub.s32 %s14, 2
      %s27 = sadd.s32 1, %s22
      %p28 = scmp.ge.s32.totalorder %s27, 1
      %s29 = scalar_select %p28, 0, %s27
      %s30 = sadd.s32 1, %s21
      %s31 = scalar_select %p28, %s30, %s21
      %p32 = scmp.ge.s32.totalorder %s31, 2
      %s33 = scalar_select %p32, 0, %s31
      %s34 = ssub.s32 %s21, %s33
      %p35 = scmp.eq.s32.totalorder %s34, 0
      %s37 = sadd.s32 %s36, 1
      %s38 = scalar_select %p35, %s36, %s37
      %p41 = pneg %p35
      %p42 = scmp.eq.s32.totalorder %s14, 1
      %p43 = por %p41, %p42
      %p44 = scmp.ne.s32.totalorder %s36, %s39
      %p45 = scmp.eq.s32.totalorder %s14, 0
      %p46 = por %p44, %p45
      %p47 = scmp.ne.s32.totalorder %s36, %s39
      %p48 = scmp.eq.s32.totalorder %s19, 1
      %p49 = por %p47, %p48
      %p50 = scmp.ne.s32.totalorder %s39, %s40
      %p51 = scmp.eq.s32.totalorder %s19, 0
      %p52 = por %p50, %p51
      %p53 = scmp.ne.s32.totalorder %s39, %s40
      %p54 = scmp.eq.s32.totalorder %s20, 1
      %p55 = por %p53, %p54
      %p57 = scmp.ne.s32.totalorder %s40, %s56
      %p58 = scmp.eq.s32.totalorder %s20, 0
      %p59 = por %p57, %p58
      %s60 = ssub.s32 %s21, %s33
      %p61 = scmp.eq.s32.totalorder %s60, 0
      %s63 = sadd.s32 %s62, 1
      %s64 = scalar_select %p61, %s62, %s63
      %p67 = pneg %p61
      %p68 = scmp.eq.s32.totalorder %s14, 1
      %p69 = por %p67, %p68
      %p70 = scmp.ne.s32.totalorder %s62, %s65
      %p71 = scmp.eq.s32.totalorder %s14, 0
      %p72 = por %p70, %p71
      %p73 = scmp.ne.s32.totalorder %s62, %s65
      %p74 = scmp.eq.s32.totalorder %s19, 1
      %p75 = por %p73, %p74
      %p76 = scmp.ne.s32.totalorder %s65, %s66
      %p77 = scmp.eq.s32.totalorder %s19, 0
      %p78 = por %p76, %p77
      %p79 = scmp.ne.s32.totalorder %s65, %s66
      %p80 = scmp.eq.s32.totalorder %s20, 1
      %p81 = por %p79, %p80
      %p83 = scmp.ne.s32.totalorder %s66, %s82
      %p84 = scmp.eq.s32.totalorder %s20, 0
      %p85 = por %p83, %p84
      %s86 = ssub.s32 %s21, %s33
      %p87 = scmp.eq.s32.totalorder %s86, 0
      %s89 = sadd.s32 %s88, 1
      %s90 = scalar_select %p87, %s88, %s89
      %p93 = pneg %p87
      %p94 = scmp.eq.s32.totalorder %s14, 1
      %p95 = por %p93, %p94
      %p96 = scmp.ne.s32.totalorder %s88, %s91
      %p97 = scmp.eq.s32.totalorder %s14, 0
      %p98 = por %p96, %p97
      %p99 = scmp.ne.s32.totalorder %s88, %s91
      %p100 = scmp.eq.s32.totalorder %s19, 1
      %p101 = por %p99, %p100
      %p102 = scmp.ne.s32.totalorder %s91, %s92
      %p103 = scmp.eq.s32.totalorder %s19, 0
      %p104 = por %p102, %p103
      %p105 = scmp.ne.s32.totalorder %s91, %s92
      %p106 = scmp.eq.s32.totalorder %s20, 1
      %p107 = por %p105, %p106
      %p109 = scmp.ne.s32.totalorder %s92, %s108
      %p110 = scmp.eq.s32.totalorder %s20, 0
      %p111 = por %p109, %p110
      %s112 = ssub.s32 %s21, %s33
      %p113 = scmp.eq.s32.totalorder %s112, 0
      %s115 = sadd.s32 %s114, 1
      %s116 = scalar_select %p113, %s114, %s115
      %p119 = pneg %p113
      %p120 = scmp.eq.s32.totalorder %s14, 1
      %p121 = por %p119, %p120
      %p122 = scmp.ne.s32.totalorder %s114, %s117
      %p123 = scmp.eq.s32.totalorder %s14, 0
      %p124 = por %p122, %p123
      %p125 = scmp.ne.s32.totalorder %s114, %s117
      %p126 = scmp.eq.s32.totalorder %s19, 1
      %p127 = por %p125, %p126
      %p128 = scmp.ne.s32.totalorder %s117, %s118
      %p129 = scmp.eq.s32.totalorder %s19, 0
      %p130 = por %p128, %p129
      %p131 = scmp.ne.s32.totalorder %s117, %s118
      %p132 = scmp.eq.s32.totalorder %s20, 1
      %p133 = por %p131, %p132
      %p135 = scmp.ne.s32.totalorder %s118, %s134
      %p136 = scmp.eq.s32.totalorder %s20, 0
      %p137 = por %p135, %p136
      %s138 = ssub.s32 %s21, %s33
      %s139 = ssub.s32 %s22, %s29
      %s140 = sor.u32 %s138, %s139
      %p141 = scmp.eq.s32.totalorder %s140, 0
      %s143 = sadd.s32 %s142, 1
      %s144 = scalar_select %p141, %s142, %s143
      %p147 = pneg %p141
      %p148 = scmp.eq.s32.totalorder %s14, 1
      %p149 = por %p147, %p148
      %p150 = scmp.ne.s32.totalorder %s142, %s145
      %p151 = scmp.eq.s32.totalorder %s14, 0
      %p152 = por %p150, %p151
      %p153 = scmp.ne.s32.totalorder %s142, %s145
      %p154 = scmp.eq.s32.totalorder %s19, 1
      %p155 = por %p153, %p154
      %p156 = scmp.ne.s32.totalorder %s145, %s146
      %p157 = scmp.eq.s32.totalorder %s19, 0
      %p158 = por %p156, %p157
      %p159 = scmp.ne.s32.totalorder %s145, %s146
      %p160 = scmp.eq.s32.totalorder %s20, 1
      %p161 = por %p159, %p160
      %p163 = scmp.ne.s32.totalorder %s146, %s162
      %p164 = scmp.eq.s32.totalorder %s20, 0
      %p165 = por %p163, %p164
      %s166 = ssub.s32 %s21, %s33
      %s167 = ssub.s32 %s22, %s29
      %s168 = sor.u32 %s166, %s167
      %p169 = scmp.eq.s32.totalorder %s168, 0
      %s171 = sadd.s32 %s170, 1
      %s172 = scalar_select %p169, %s170, %s171
      %p175 = pneg %p169
      %p176 = scmp.eq.s32.totalorder %s14, 1
      %p177 = por %p175, %p176
      %p178 = scmp.ne.s32.totalorder %s170, %s173
      %p179 = scmp.eq.s32.totalorder %s14, 0
      %p180 = por %p178, %p179
      %p181 = scmp.ne.s32.totalorder %s170, %s173
      %p182 = scmp.eq.s32.totalorder %s19, 1
      %p183 = por %p181, %p182
      %p184 = scmp.ne.s32.totalorder %s173, %s174
      %p185 = scmp.eq.s32.totalorder %s19, 0
      %p186 = por %p184, %p185
      %p187 = scmp.ne.s32.totalorder %s173, %s174
      %p188 = scmp.eq.s32.totalorder %s20, 1
      %p189 = por %p187, %p188
      %p191 = scmp.ne.s32.totalorder %s174, %s190
      %p192 = scmp.eq.s32.totalorder %s20, 0
      %p193 = por %p191, %p192
      %p194 = scmp.le.s32.totalorder 1, %s14
      %p195 = scmp.lt.s32.totalorder %s14, 3
      %p196 = pnand %p194, %p195
      %p197 = pneg %p196
      // Predicated region
      $region9: #{tpu_custom_call.1} parent=5 // pred_check
        _
      $region10: #{tpu_custom_call.1} parent=5 // pred_check_branch
        %199 = sbr.rel (%p196) target = $region12
      $region11: #{tpu_custom_call.1} parent=5 // pred_region
        %s200 = ssub.s32 %s14, 1
      $region12: #{tpu_custom_call.1} parent=5 // pred_fallthru
        _
      %p201 = scmp.lt.s32.totalorder %s14, 2
      // Predicated region
      $region13: #{tpu_custom_call.1} parent=5 // pred_check
        %p202 = pneg %p201
      $region14: #{tpu_custom_call.1} parent=5 // pred_check_branch
        %204 = sbr.rel (%p202) target = $region16
      $region15: #{tpu_custom_call.1} parent=5 // pred_region
        // Predicated region
        $region17: #{tpu_custom_call.1} parent=15 // pred_check
          %p205 = pneg %p46
        $region18: #{tpu_custom_call.1} parent=15 // pred_check_branch
          %207 = sbr.rel (%p205) target = $region20
        $region19: #{tpu_custom_call.1} parent=15 // pred_region
          %p208 = scmp.lt.s32.totalorder %s21, 1
          %s209 = scalar_select %p208, %s21, 1
          %s210 = smul.addr %s209, 8
          %s211 = scalar_lea.vmem %s0, %s210
        $region20: #{tpu_custom_call.1} parent=15 // pred_fallthru
          _
        // Predicated region
        $region21: #{tpu_custom_call.1} parent=15 // pred_check
          %p212 = pneg %p72
        $region22: #{tpu_custom_call.1} parent=15 // pred_check_branch
          %214 = sbr.rel (%p212) target = $region24
        $region23: #{tpu_custom_call.1} parent=15 // pred_region
          %p215 = scmp.lt.s32.totalorder %s21, 1
          %s216 = scalar_select %p215, %s21, 1
          %s217 = smul.addr %s216, 8
          %s218 = scalar_lea.vmem %s1, %s217
        $region24: #{tpu_custom_call.1} parent=15 // pred_fallthru
          _
        // Predicated region
        $region25: #{tpu_custom_call.1} parent=15 // pred_check
          %p219 = pneg %p98
        $region26: #{tpu_custom_call.1} parent=15 // pred_check_branch
          %221 = sbr.rel (%p219) target = $region28
        $region27: #{tpu_custom_call.1} parent=15 // pred_region
          %p222 = scmp.lt.s32.totalorder %s21, 1
          %s223 = scalar_select %p222, %s21, 1
          %s224 = smul.addr %s223, 8
          %s225 = scalar_lea.vmem %s2, %s224
        $region28: #{tpu_custom_call.1} parent=15 // pred_fallthru
          _
        // Predicated region
        $region29: #{tpu_custom_call.1} parent=15 // pred_check
          %p226 = pneg %p124
        $region30: #{tpu_custom_call.1} parent=15 // pred_check_branch
          %228 = sbr.rel (%p226) target = $region32
        $region31: #{tpu_custom_call.1} parent=15 // pred_region
          %p229 = scmp.lt.s32.totalorder %s21, 1
          %s230 = scalar_select %p229, %s21, 1
          %s231 = smul.addr %s230, 8
          %s232 = scalar_lea.vmem %s3, %s231
        $region32: #{tpu_custom_call.1} parent=15 // pred_fallthru
          _
        // Predicated region
        $region33: #{tpu_custom_call.1} parent=15 // pred_check
          %p233 = pneg %p152
        $region34: #{tpu_custom_call.1} parent=15 // pred_check_branch
          %235 = sbr.rel (%p233) target = $region36
        $region35: #{tpu_custom_call.1} parent=15 // pred_region
          %s236 = smul.u32 2, %s22
          %p237 = scmp.lt.s32.totalorder %s21, 1
          %s238 = scalar_select %p237, %s21, 1
          %p239 = scmp.lt.s32.totalorder %s236, 1
          %s240 = scalar_select %p239, %s236, 1
          %s241 = smul.addr %s238, 2
          %s242 = sadd.s32 %s240, %s241
          %s243 = smul.addr %s242, 8
          %s244 = scalar_lea.vmem %s4, %s243
          %s245 = smul.u32 2, %s22
        $region36: #{tpu_custom_call.1} parent=15 // pred_fallthru
          _
      $region16: #{tpu_custom_call.1} parent=5 // pred_fallthru
        _
      %p246 = scmp.le.s32.totalorder 1, %s14
      %p247 = scmp.lt.s32.totalorder %s14, 3
      %p248 = pnand %p246, %p247
      %p249 = pneg %p248
      // Predicated region
      $region37: #{tpu_custom_call.1} parent=5 // pred_check
        _
      $region38: #{tpu_custom_call.1} parent=5 // pred_check_branch
        %251 = sbr.rel (%p248) target = $region40
      $region39: #{tpu_custom_call.1} parent=5 // pred_region
        %s252 = ssub.s32 %s14, 1
        %p253 = scmp.lt.s32.totalorder %s23, 1
        %s254 = scalar_select %p253, %s23, 1
        %s255 = smul.addr %s254, 8
        %s256 = scalar_lea.vmem %s0, %s255
        %p257 = pneg %p52
        %p258 = pneg %p49
        %p259 = scmp.lt.s32.totalorder %s23, 1
        %s260 = scalar_select %p259, %s23, 1
        %s261 = smul.addr %s260, 8
        %s262 = scalar_lea.vmem %s1, %s261
        %p263 = pneg %p78
        %p264 = pneg %p75
        %p265 = scmp.lt.s32.totalorder %s23, 1
        %s266 = scalar_select %p265, %s23, 1
        %s267 = smul.addr %s266, 8
        %s268 = scalar_lea.vmem %s2, %s267
        %p269 = pneg %p104
        %p270 = pneg %p101
        %p271 = scmp.lt.s32.totalorder %s23, 1
        %s272 = scalar_select %p271, %s23, 1
        %s273 = smul.addr %s272, 8
        %s274 = scalar_lea.vmem %s3, %s273
        %p275 = pneg %p130
        %p276 = pneg %p127
        %s277 = smul.u32 2, %s24
        %p278 = scmp.lt.s32.totalorder %s23, 1
        %s279 = scalar_select %p278, %s23, 1
        %p280 = scmp.lt.s32.totalorder %s277, 1
        %s281 = scalar_select %p280, %s277, 1
        %s282 = smul.addr %s279, 2
        %s283 = sadd.s32 %s281, %s282
        %s284 = smul.addr %s283, 8
        %s285 = scalar_lea.vmem %s4, %s284
        %p286 = pneg %p158
        %p287 = pneg %p155
        %p288 = pneg %p186
        %p289 = pneg %p183
        %s290 = sand.u32 %s173, 1
        %s291 = scalar_lea.sflag [#allocation3], %s290
        %s292 = sand.u32 %s173, 1
        %s293 = smul.addr %s292, 16
        %s294 = scalar_lea.vmem [#allocation2], %s293
        %p295 = scmp.lt.s32.totalorder %s23, 1
        %s296 = scalar_select %p295, %s23, 1
        %s297 = smul.addr %s296, 8
        %s298 = scalar_lea.vmem %s0, %s297
        %p299 = scmp.lt.s32.totalorder %s23, 1
        %s300 = scalar_select %p299, %s23, 1
        %s301 = smul.addr %s300, 8
        %s302 = scalar_lea.vmem %s1, %s301
        %p303 = scmp.lt.s32.totalorder %s23, 1
        %s304 = scalar_select %p303, %s23, 1
        %s305 = smul.addr %s304, 8
        %s306 = scalar_lea.vmem %s2, %s305
        %p307 = scmp.lt.s32.totalorder %s23, 1
        %s308 = scalar_select %p307, %s23, 1
        %s309 = smul.addr %s308, 8
        %s310 = scalar_lea.vmem %s3, %s309
        %s311 = smul.u32 2, %s24
        %p312 = scmp.lt.s32.totalorder %s23, 1
        %s313 = scalar_select %p312, %s23, 1
        %p314 = scmp.lt.s32.totalorder %s311, 1
        %s315 = scalar_select %p314, %s311, 1
        %s316 = smul.addr %s313, 2
        %s317 = sadd.s32 %s315, %s316
        %s318 = smul.addr %s317, 8
        %s319 = scalar_lea.vmem %s4, %s318
        %s320 = smul.u32 2, %s24
        %s321 = smul.u32 2, %s24
        %v322 = vld [vmem:[%s319] sm:$0xff]
        %v323 = vld [vmem:[%s319 + $0x8] sm:$0xff]
        %v324 = vld [vmem:[%s298] sm:$0xff]
        %326 = vset.pattern.permute.xlu0 0
        %327 = vperm.xlu0 %326, %v324
        %v328 = vpop.permute.xlu0 %327
        %v330 = vmul.f32 %v322, %v328
        %v331 = vmul.f32 %v323, %v328
        %v332 = vld [vmem:[%s302] sm:$0xff]
        %334 = vset.pattern.permute.xlu0 0
        %335 = vperm.xlu0 %334, %v332
        %v336 = vpop.permute.xlu0 %335
        %v338 = vadd.f32 %v330, %v336
        %v339 = vadd.f32 %v331, %v336
        %v340 = vmax.f32 %v338, 0.0
        %v341 = vmax.f32 %v339, 0.0
        %v342 = vld [vmem:[%s306] sm:$0xff]
        %344 = vset.pattern.permute.xlu0 0
        %345 = vperm.xlu0 %344, %v342
        %v346 = vpop.permute.xlu0 %345
        %v348 = vmul.f32 %v340, %v346
        %v349 = vmul.f32 %v341, %v346
        %v350 = vld [vmem:[%s310] sm:$0xff]
        %352 = vset.pattern.permute.xlu0 0
        %353 = vperm.xlu0 %352, %v350
        %v354 = vpop.permute.xlu0 %353
        %v356 = vadd.f32 %v348, %v354
        %v357 = vadd.f32 %v349, %v354
        %358 = vst [vmem:[%s294] sm:$0xff] %v356
        %359 = vst [vmem:[%s294 + $0x8] sm:$0xff] %v357
        %s360 = sand.u32 %s173, 1
        %s361 = scalar_lea.sflag [#allocation3], %s360
        %s362 = sand.u32 %s173, 1
        %s363 = smul.addr %s362, 16
        %s364 = scalar_lea.vmem [#allocation2], %s363
        // Predicated region
        $region41: #{tpu_custom_call.1} parent=39 // pred_check
          %p365 = pneg %p183
        $region42: #{tpu_custom_call.1} parent=39 // pred_check_branch
          %367 = sbr.rel (%p365) target = $region44
        $region43: #{tpu_custom_call.1} parent=39 // pred_region
          %s368 = smul.u32 2, %s24
          %s370 = ssub.s32 256, 256
          %371 = vsyncadd %s361, %s370
          %s372 = smul.addr %s23, 2
          %s373 = sadd.s32 %s368, %s372
          %s374 = smul.addr %s373, 128
          %s375 = scalar_lea.hbm %s5, %s374
          %s377 = sshll.u32 %s364, 4
          %s378 = int_to_ptr.vmem [resolvable:$true] %s377
          %380 = dma.vmem_to_hbm [thread:$0]  %s378, 256, %s375, %s361
        $region44: #{tpu_custom_call.1} parent=39 // pred_fallthru
          _
      $region40: #{tpu_custom_call.1} parent=5 // pred_fallthru
        _
      %p381 = scmp.le.s32.totalorder 2, %s14
      // Predicated region
      $region45: #{tpu_custom_call.1} parent=5 // pred_check
        %p382 = pneg %p381
      $region46: #{tpu_custom_call.1} parent=5 // pred_check_branch
        %384 = sbr.rel (%p382) target = $region48
      $region47: #{tpu_custom_call.1} parent=5 // pred_region
        %s385 = ssub.s32 %s14, 2
        // Predicated region
        $region49: #{tpu_custom_call.1} parent=47 // pred_check
          %p386 = pneg %p189
        $region50: #{tpu_custom_call.1} parent=47 // pred_check_branch
          %388 = sbr.rel (%p386) target = $region52
        $region51: #{tpu_custom_call.1} parent=47 // pred_region
          %s389 = sand.u32 %s174, 1
          %s390 = scalar_lea.sflag [#allocation3], %s389
          %s391 = sand.u32 %s174, 1
          %s392 = smul.addr %s391, 16
          %s393 = scalar_lea.vmem [#allocation2], %s392
          %394 = dma.done %s390, 256
        $region52: #{tpu_custom_call.1} parent=47 // pred_fallthru
          _
      $region48: #{tpu_custom_call.1} parent=5 // pred_fallthru
        _
    $region6: #{tpu_custom_call.1} parent=1 // loop_footer
      %s18 = sadd.s32 1, %s14
    $region7: #{tpu_custom_call.1} parent=1 // loop_footer_branch
      %13 = sbr.rel target = $region3
    $region8: #{tpu_custom_call.1} parent=1 // loop_exit
      _
    %395 = vsyncpa [#allocation3], 1
    %s396 = scalar_lea.sflag [#allocation3], 1
    %397 = vsyncpa %s396, 1

</llo_original>
